<compile_context>
chip_gen: v5e
topology: v5e:2x2
jax: 0.10.0
libtpu: 0.0.40
codegen_flags: <defaults>
</compile_context>

<pallas_src>
import functools
import numpy as np
import jax
import jax.numpy as jnp
from jax.experimental import pallas as pl
from jax.experimental.pallas import tpu as pltpu

# ---------------- static configuration ----------------
N_NODES = 8
N_EDGES = 20
N_ACTIVE = 16
LATENT_DIM = 16
MUL = 8                    # multiplicity of each irrep
DIM_0 = MUL                # scalar block width (8)
DIM_1 = 3 * MUL            # l=1 block width (24, component-major x|y|z)
FEAT_DIM = DIM_0 + DIM_1   # 32
NUM_ATOM_TYPES = 4
AVG_NUM_NEIGHBORS = 8.0
EPS = 1e-5

# packed-matmul dimensions
SO2_IN = 80                # [gs|hs|gpz|hpz|gpx|hpx|gpy|hpy|lat]
SO2_OUT = 56               # [scal | gates x3 replicated | opz | opx | opy]
PE_IN = 48                 # [silu(scal) | gated (z|x|y) | lat]
PE_OUT = 64                # [ps | pv (z|x|y) | wenv (s|v|v|v)]

# parameter-slab row offsets (8-row aligned)
R_PK = 0
R_SO2 = 8
R_PE = R_SO2 + SO2_IN      # 88
R_RES = R_PE + PE_IN       # 136
SLAB_ROWS = R_RES + FEAT_DIM   # 168
SLAB_COLS = 80

# e3nn `normalize2mom` constants for the Gate activations, hard-coded
# (second moment of silu / sigmoid under N(0,1); avoids import-time MC noise).
SILU_CST = 1.6790
SIGMOID_CST = 1.8462


# ---------------- fused Pallas kernel ----------------
def update_node_kernel(nf_ref, hf_ref, latev_ref, cen_ref, slab_ref,
                       out_ref, pack_ref):
    f32 = jnp.float32
    dot = functools.partial(jnp.dot, preferred_element_type=f32)

    # ---- constants: ONE packed slab, static sub-windows (single DMA) ----
    pk = slab_ref[0:1, :]                                    # (1, 80)
    ln_ws = pk[:, 0:MUL]
    ln_bs = pk[:, MUL:2 * MUL]
    ln_wv3 = pk[:, 2 * MUL:2 * MUL + DIM_1]                  # (1, 24) pre-tiled
    bp0 = pk[:, 40:48]                                       # lin_post scalar bias
    b_res = pk[:, 48:80]                                     # residual bias (out layout)
    w_so2 = slab_ref[R_SO2:R_SO2 + SO2_IN, 0:SO2_OUT]        # (80, 56)
    w_pe = slab_ref[R_PE:R_PE + PE_IN, 0:PE_OUT]             # (48, 64)
    w_res = slab_ref[R_RES:R_RES + FEAT_DIM, 0:FEAT_DIM]     # (32, 32)

    # ---- separable layer norm on node features, staged as one (N, 32) tile ----
    nf = nf_ref[...]                                         # (N, 32)
    nf_s = nf[:, :DIM_0]
    nf_v = nf[:, DIM_0:]
    mean = jnp.mean(nf_s, axis=-1, keepdims=True)
    cen_s = nf_s - mean
    var = jnp.mean(cen_s * cen_s, axis=-1, keepdims=True)
    # TODO(synk): pooled RMS over all 24 l=1 components; dptb's SeperableLayerNorm
    # may instead normalize each channel's 3-vector separately.
    vnorm = jnp.mean(nf_v * nf_v, axis=-1, keepdims=True)
    pack_ref[0:N_NODES, 0:DIM_0] = cen_s * jax.lax.rsqrt(var + EPS) * ln_ws + ln_bs
    pack_ref[0:N_NODES, DIM_0:FEAT_DIM] = nf_v * jax.lax.rsqrt(vnorm + EPS) * ln_wv3

    # ---- gather normalized node features to active edges: ONE one-hot matmul ----
    # (edge_center[active] pre-gathered in the wrapper; -1/OOB indices -> zero rows)
    cen_idx = cen_ref[...]                                   # (E, 1) int32
    cen_oh = (jax.lax.broadcasted_iota(jnp.int32, (N_ACTIVE, N_NODES), 1)
              == cen_idx).astype(f32)                        # (E, N)
    g = dot(cen_oh, pack_ref[0:N_NODES, 0:FEAT_DIM])         # (E, 32)

    lat = latev_ref[:, 0:LATENT_DIM]                         # (E, 16)
    ev = latev_ref[:, LATENT_DIM:LATENT_DIM + 3]             # (E, 3)

    # ---- edge-aligned frame (rows e1, e2, u ; R @ unit(edge) = e_z) ----
    # TODO(synk): helper-axis gauge, not e3nn's Wigner-based edge frame; zero-length
    # edge vectors are only protected by the +1e-12 inside rsqrt.
    evx, evy, evz = ev[:, 0:1], ev[:, 1:2], ev[:, 2:3]
    inv_n = jax.lax.rsqrt(evx * evx + evy * evy + evz * evz + 1e-12)
    ux, uy, uz = evx * inv_n, evy * inv_n, evz * inv_n
    hxm = (jnp.abs(uz) > 0.9).astype(f32)                    # helper = x-axis else z-axis
    hzm = 1.0 - hxm
    e1x = uy * hzm
    e1y = uz * hxm - ux * hzm
    e1z = -uy * hxm
    inv1 = jax.lax.rsqrt(e1x * e1x + e1y * e1y + e1z * e1z + 1e-12)
    e1x, e1y, e1z = e1x * inv1, e1y * inv1, e1z * inv1
    e2x = uy * e1z - uz * e1y
    e2y = uz * e1x - ux * e1z
    e2z = ux * e1y - uy * e1x

    # hoist lane-broadcasts once (each coefficient reused 3x: g-fwd, h-fwd, back)
    bc = lambda c: jnp.broadcast_to(c, (N_ACTIVE, MUL))
    b_e1x, b_e1y, b_e1z = bc(e1x), bc(e1y), bc(e1z)
    b_e2x, b_e2y, b_e2z = bc(e2x), bc(e2y), bc(e2z)
    b_ux, b_uy, b_uz = bc(ux), bc(uy), bc(uz)

    # ---- forward-rotate gathered + hidden l=1 blocks; stage the packed SO2 LHS ----
    hf = hf_ref[...]                                         # (E, 32) hidden features
    gvx, gvy, gvz = g[:, 8:16], g[:, 16:24], g[:, 24:32]
    hvx, hvy, hvz = hf[:, 8:16], hf[:, 16:24], hf[:, 24:32]
    pack_ref[:, 0:8] = g[:, 0:8]                                       # gs
    pack_ref[:, 8:16] = hf[:, 0:8]                                     # hs
    pack_ref[:, 16:24] = b_ux * gvx + b_uy * gvy + b_uz * gvz          # gpz
    pack_ref[:, 24:32] = b_ux * hvx + b_uy * hvy + b_uz * hvz          # hpz
    pack_ref[:, 32:40] = b_e1x * gvx + b_e1y * gvy + b_e1z * gvz       # gpx
    pack_ref[:, 40:48] = b_e1x * hvx + b_e1y * hvy + b_e1z * hvz       # hpx
    pack_ref[:, 48:56] = b_e2x * gvx + b_e2y * gvy + b_e2z * gvz       # gpy
    pack_ref[:, 56:64] = b_e2x * hvx + b_e2y * hvy + b_e2z * hvz       # hpy
    pack_ref[:, 64:80] = lat

    # ---- SO2-style linear (self.tp): ONE K=80 dot against the packed weight ----
    acc = dot(pack_ref[...], w_so2)                          # (E, 56)

    # ---- Gate, then ONE block-diag dot fusing lin_post + env_embed_mlps ----
    scal = acc[:, 0:MUL]
    gates = jax.nn.sigmoid(acc[:, MUL:MUL + DIM_1])          # gate cols replicated/comp
    pack_ref[:, 0:8] = scal * jax.nn.sigmoid(scal)           # silu (cst folded in w_pe)
    pack_ref[:, 8:32] = acc[:, MUL + DIM_1:] * gates         # gated l=1 [z|x|y]
    pack_ref[:, 32:48] = lat
    pe = dot(pack_ref[:, 0:PE_IN], w_pe)                     # (E, 64) [ps | pv | wenv]

    # env weighting (E3ElementLinear); rsqrt(avg_nbr) * c_new folded into wenv block
    msg_s = (pe[:, 0:MUL] + bp0) * pe[:, 32:40]              # (E, 8)
    msg_v = pe[:, MUL:MUL + DIM_1] * pe[:, 40:64]            # (E, 24) [z|x|y]
    pvz, pvx, pvy = msg_v[:, 0:MUL], msg_v[:, MUL:2 * MUL], msg_v[:, 2 * MUL:]

    # ---- back-rotate l=1 message to the lab frame; stage in OUTPUT layout ----
    pack_ref[:, 0:8] = msg_s
    pack_ref[:, 8:16] = b_e1x * pvx + b_e2x * pvy + b_ux * pvz     # lab x
    pack_ref[:, 16:24] = b_e1y * pvx + b_e2y * pvy + b_uy * pvz    # lab y
    pack_ref[:, 24:32] = b_e1z * pvx + b_e2z * pvy + b_uz * pvz    # lab z

    # ---- scatter-sum to nodes + residual path, ONE full-width (8, 32) store ----
    agg = jax.lax.dot_general(cen_oh, pack_ref[:, 0:FEAT_DIM],
                              dimension_numbers=(((0,), (0,)), ((), ())),
                              preferred_element_type=f32)    # (N, 32)
    res = dot(nf, w_res) + b_res                             # (N, 32); c_old folded
    out_ref[...] = agg + res


# ---------------- host-side parameter construction ----------------
def init_params(key):
    """Raw parameters mirroring the torch module's sub-layers."""
    ks = jax.random.split(key, 8)
    n = lambda k, shape: jax.random.normal(k, shape, dtype=jnp.float32)
    return dict(
        ln_ws=jnp.ones((1, MUL), jnp.float32),
        ln_bs=jnp.zeros((1, MUL), jnp.float32),
        ln_wv=jnp.ones((1, MUL), jnp.float32),
        wm0=n(ks[0], (4 * MUL + LATENT_DIM, 3 * MUL)),   # tp m=0 path (48 -> 24)
        wm1r=n(ks[1], (2 * MUL, MUL)),                   # tp m=+-1 complex weights
        wm1i=n(ks[2], (2 * MUL, MUL)),
        wp0=n(ks[3], (MUL, MUL)),                        # lin_post
        bp0=jnp.zeros((1, MUL), jnp.float32),
        wp1=n(ks[4], (MUL, MUL)),
        we=n(ks[5], (LATENT_DIM, 2 * MUL)),              # env_embed_mlps
        wr0=n(ks[6], (MUL, MUL)),                        # linear_res
        br0=jnp.zeros((1, MUL), jnp.float32),
        wr1=n(ks[7], (MUL, MUL)),
    )


def _block_diag3(w):
    z = jnp.zeros_like(w)
    return jnp.concatenate([
        jnp.concatenate([w, z, z], axis=1),
        jnp.concatenate([z, w, z], axis=1),
        jnp.concatenate([z, z, w], axis=1)], axis=0)


def pack_params(p):
    """Fold every constant scale into the weights and pack them into ONE slab."""
    f32 = jnp.float32
    z = lambda r, c: jnp.zeros((r, c), f32)

    s0 = 1.0 / np.sqrt(4 * MUL + LATENT_DIM)      # tp m=0 fan-in (48)
    s1 = 1.0 / np.sqrt(2 * MUL)                   # tp m=+-1 fan-in (16)
    invp = 1.0 / np.sqrt(MUL)                     # e3nn Linear fan-in (8)
    norm_const = 1.0 / np.sqrt(AVG_NUM_NEIGHBORS)
    upd = 1.0 / (1.0 + np.exp(-0.0))              # sigmoid(_res_update_params = 0)
    c_old = 1.0 / np.sqrt(upd * upd + 1.0)
    c_new = upd * c_old

    # --- SO2 linear (80, 56), rows = [gs|hs|gpz|hpz|gpx|hpx|gpy|hpy|lat] ---
    wm0 = p["wm0"] * s0                           # (48, 24) cols = [scal | gates | opz]

    def m0_rows(blk):                             # -> (rows, 56) [scal|g|g|g|opz|0|0]
        scal, g, opz = blk[:, 0:MUL], blk[:, MUL:2 * MUL], blk[:, 2 * MUL:3 * MUL]
        return jnp.concatenate([scal, g, g, g, opz, z(blk.shape[0], 2 * MUL)], axis=-1)

    def m1_rows(wx, wy):                          # -> (8, 56) [0(40)|opx|opy]
        return jnp.concatenate([z(MUL, 5 * MUL), wx, wy], axis=-1)

    wr_g, wr_h = p["wm1r"][0:MUL] * s1, p["wm1r"][MUL:2 * MUL] * s1
    wi_g, wi_h = p["wm1i"][0:MUL] * s1, p["wm1i"][MUL:2 * MUL] * s1

    w_so2 = jnp.concatenate([
        m0_rows(wm0[0:8]),        # gathered scalars
        m0_rows(wm0[8:16]),       # hidden scalars
        m0_rows(wm0[16:24]),      # gathered m=0 (pz)
        m0_rows(wm0[24:32]),      # hidden m=0 (pz)
        m1_rows(wr_g, wi_g),      # gathered px
        m1_rows(wr_h, wi_h),      # hidden px
        m1_rows(-wi_g, wr_g),     # gathered py
        m1_rows(-wi_h, wr_h),     # hidden py
        m0_rows(wm0[32:48]),      # latent (m=0 path)
    ], axis=0)                    # (80, 56)

    # --- lin_post + env_embed_mlps fused into ONE block-diag (48, 64) ---
    wp0 = p["wp0"] * (SILU_CST * invp)
    wp1bd = _block_diag3(p["wp1"]) * (SIGMOID_CST * invp)
    we_s, we_v = p["we"][:, 0:MUL], p["we"][:, MUL:2 * MUL]
    we32 = jnp.concatenate([we_s, we_v, we_v, we_v], axis=-1) * \
        (norm_const * c_new / np.sqrt(LATENT_DIM))                    # (16, 32)
    w_pe = jnp.concatenate([
        jnp.concatenate([wp0, z(MUL, DIM_1), z(MUL, FEAT_DIM)], axis=1),
        jnp.concatenate([z(DIM_1, MUL), wp1bd, z(DIM_1, FEAT_DIM)], axis=1),
        jnp.concatenate([z(LATENT_DIM, MUL + DIM_1), we32], axis=1),
    ], axis=0)                                                        # (48, 64)

    # --- residual linear_res as ONE block-diag (32, 32) in output layout ---
    wr0 = p["wr0"] * (invp * c_old)
    wr1bd = _block_diag3(p["wr1"]) * (invp * c_old)
    w_res = jnp.concatenate([
        jnp.concatenate([wr0, z(MUL, DIM_1)], axis=1),
        jnp.concatenate([z(DIM_1, MUL), wr1bd], axis=1),
    ], axis=0)                                                        # (32, 32)

    # --- per-channel vectors, all in one 80-lane row ---
    ln_wv3 = jnp.concatenate([p["ln_wv"]] * 3, axis=-1)               # (1, 24)
    b_res = jnp.concatenate([p["br0"] * c_old, z(1, DIM_1)], axis=-1)  # (1, 32)
    pk = jnp.concatenate([p["ln_ws"], p["ln_bs"], ln_wv3, p["bp0"], b_res],
                         axis=-1)                                     # (1, 80)

    def pad(a, rows):
        return jnp.pad(a, ((0, rows - a.shape[0]), (0, SLAB_COLS - a.shape[1])))

    slab = jnp.concatenate([
        pad(pk, R_SO2 - R_PK),
        pad(w_so2, R_PE - R_SO2),
        pad(w_pe, R_RES - R_PE),
        pad(w_res, SLAB_ROWS - R_RES),
    ], axis=0)                                                        # (168, 80)
    return slab


# ---------------- JAX wrapper ----------------
@jax.jit
def update_node_forward(slab, latents, node_features, hidden_features,
                        atom_type, node_onehot, edge_index, edge_vector, active_edges):
    # env_sum_normalizations is a 0-dim tensor here -> scalar, folded into the slab.
    del atom_type, node_onehot
    act = active_edges.astype(jnp.int32)
    # KB-scale index gathers stay in XLA (they fuse into input staging); the kernel
    # receives pre-gathered per-active-edge arrays and the edge-center indices.
    cen = edge_index[0][act].reshape(-1, 1).astype(jnp.int32)            # (E_act, 1)
    latev = jnp.concatenate([latents[act], edge_vector[act]], axis=-1)   # (E_act, 19)

    vmem = lambda: pl.BlockSpec(memory_space=pltpu.MemorySpace.VMEM)
    return pl.pallas_call(
        update_node_kernel,
        out_shape=jax.ShapeDtypeStruct((N_NODES, FEAT_DIM), jnp.float32),
        in_specs=[vmem() for _ in range(5)],
        out_specs=vmem(),
        scratch_shapes=[pltpu.VMEM((N_ACTIVE, SO2_IN), jnp.float32)],
    )(node_features, hidden_features, latev, cen, slab)


if __name__ == "__main__":
    key = jax.random.PRNGKey(0)
    k_par, k_lat, k_nf, k_hid, k_at, k_ei, k_ev = jax.random.split(key, 7)

    slab = pack_params(init_params(k_par))

    latents = jax.random.normal(k_lat, (N_EDGES, LATENT_DIM), dtype=jnp.float32)
    node_features = jax.random.normal(k_nf, (N_NODES, FEAT_DIM), dtype=jnp.float32)
    hidden_features = jax.random.normal(k_hid, (N_ACTIVE, FEAT_DIM), dtype=jnp.float32)
    atom_type = jax.random.randint(k_at, (N_NODES,), 0, NUM_ATOM_TYPES)
    node_onehot = jax.nn.one_hot(atom_type, NUM_ATOM_TYPES, dtype=jnp.float32)
    edge_index = jax.random.randint(k_ei, (2, N_EDGES), 0, N_NODES)
    edge_vector = jax.random.normal(k_ev, (N_EDGES, 3), dtype=jnp.float32)
    active_edges = jnp.arange(N_ACTIVE, dtype=jnp.int32)

    out = update_node_forward(slab, latents, node_features, hidden_features,
                              atom_type, node_onehot, edge_index, edge_vector,
                              active_edges)
    out = jax.block_until_ready(out)

    assert out.shape == (N_NODES, FEAT_DIM), out.shape
    assert bool(jnp.all(jnp.isfinite(out)))
    print("KERNEL_OK")
</pallas_src>

<mosaic_0001>
module attributes {stable_mosaic.version = 11 : i64} {
  func.func @update_node_kernel(%arg0: memref<8x32xf32, #tpu.memory_space<vmem>>, %arg1: memref<16x32xf32, #tpu.memory_space<vmem>>, %arg2: memref<16x19xf32, #tpu.memory_space<vmem>>, %arg3: memref<16x1xi32, #tpu.memory_space<vmem>>, %arg4: memref<168x80xf32, #tpu.memory_space<vmem>>, %arg5: memref<8x32xf32, #tpu.memory_space<vmem>>, %arg6: memref<16x80xf32, #tpu.memory_space<vmem>>) attributes {dimension_semantics = [], scalar_prefetch = 0 : i64, scratch_operands = 1 : i64, tpu.core_type = #tpu.core_type<tc>} {
    %c0 = arith.constant 0 : index
    %c0_0 = arith.constant 0 : index
    %0 = vector.load %arg4[%c0, %c0_0] : memref<168x80xf32, #tpu.memory_space<vmem>>, vector<1x80xf32>
    %1 = vector.extract_strided_slice %0 {offsets = [0, 0], sizes = [1, 8], strides = [1, 1]} : vector<1x80xf32> to vector<1x8xf32>
    %2 = vector.extract_strided_slice %0 {offsets = [0, 8], sizes = [1, 8], strides = [1, 1]} : vector<1x80xf32> to vector<1x8xf32>
    %3 = vector.extract_strided_slice %0 {offsets = [0, 16], sizes = [1, 24], strides = [1, 1]} : vector<1x80xf32> to vector<1x24xf32>
    %4 = vector.extract_strided_slice %0 {offsets = [0, 40], sizes = [1, 8], strides = [1, 1]} : vector<1x80xf32> to vector<1x8xf32>
    %5 = vector.extract_strided_slice %0 {offsets = [0, 48], sizes = [1, 32], strides = [1, 1]} : vector<1x80xf32> to vector<1x32xf32>
    %c8 = arith.constant 8 : index
    %c0_1 = arith.constant 0 : index
    %6 = vector.load %arg4[%c8, %c0_1] : memref<168x80xf32, #tpu.memory_space<vmem>>, vector<80x56xf32>
    %c88 = arith.constant 88 : index
    %c0_2 = arith.constant 0 : index
    %7 = vector.load %arg4[%c88, %c0_2] : memref<168x80xf32, #tpu.memory_space<vmem>>, vector<48x64xf32>
    %c136 = arith.constant 136 : index
    %c0_3 = arith.constant 0 : index
    %8 = vector.load %arg4[%c136, %c0_3] : memref<168x80xf32, #tpu.memory_space<vmem>>, vector<32x32xf32>
    %c0_4 = arith.constant 0 : index
    %c0_5 = arith.constant 0 : index
    %9 = vector.load %arg0[%c0_4, %c0_5] : memref<8x32xf32, #tpu.memory_space<vmem>>, vector<8x32xf32>
    %10 = vector.extract_strided_slice %9 {offsets = [0, 0], sizes = [8, 8], strides = [1, 1]} : vector<8x32xf32> to vector<8x8xf32>
    %11 = vector.extract_strided_slice %9 {offsets = [0, 8], sizes = [8, 24], strides = [1, 1]} : vector<8x32xf32> to vector<8x24xf32>
    %cst = arith.constant dense<0.000000e+00> : vector<8xf32>
    %12 = vector.multi_reduction <add>, %10, %cst [1] : vector<8x8xf32> to vector<8xf32>
    %13 = vector.shape_cast %12 : vector<8xf32> to vector<8x1xf32>
    %cst_6 = arith.constant 8.000000e+00 : f32
    %14 = vector.broadcast %cst_6 : f32 to vector<8x1xf32>
    %15 = arith.divf %13, %14 : vector<8x1xf32>
    %16 = vector.broadcast %15 : vector<8x1xf32> to vector<8x8xf32>
    %17 = arith.subf %10, %16 : vector<8x8xf32>
    %18 = arith.mulf %17, %17 : vector<8x8xf32>
    %cst_7 = arith.constant dense<0.000000e+00> : vector<8xf32>
    %19 = vector.multi_reduction <add>, %18, %cst_7 [1] : vector<8x8xf32> to vector<8xf32>
    %20 = vector.shape_cast %19 : vector<8xf32> to vector<8x1xf32>
    %cst_8 = arith.constant 8.000000e+00 : f32
    %21 = vector.broadcast %cst_8 : f32 to vector<8x1xf32>
    %22 = arith.divf %20, %21 : vector<8x1xf32>
    %23 = arith.mulf %11, %11 : vector<8x24xf32>
    %cst_9 = arith.constant dense<0.000000e+00> : vector<8xf32>
    %24 = vector.multi_reduction <add>, %23, %cst_9 [1] : vector<8x24xf32> to vector<8xf32>
    %25 = vector.shape_cast %24 : vector<8xf32> to vector<8x1xf32>
    %cst_10 = arith.constant 2.400000e+01 : f32
    %26 = vector.broadcast %cst_10 : f32 to vector<8x1xf32>
    %27 = arith.divf %25, %26 : vector<8x1xf32>
    %cst_11 = arith.constant 9.99999974E-6 : f32
    %28 = vector.broadcast %cst_11 : f32 to vector<8x1xf32>
    %29 = arith.addf %22, %28 : vector<8x1xf32>
    %30 = math.rsqrt %29 : vector<8x1xf32>
    %31 = vector.broadcast %30 : vector<8x1xf32> to vector<8x8xf32>
    %32 = arith.mulf %17, %31 : vector<8x8xf32>
    %33 = vector.broadcast %1 : vector<1x8xf32> to vector<8x8xf32>
    %34 = arith.mulf %32, %33 : vector<8x8xf32>
    %35 = vector.broadcast %2 : vector<1x8xf32> to vector<8x8xf32>
    %36 = arith.addf %34, %35 : vector<8x8xf32>
    %c0_12 = arith.constant 0 : index
    %c0_13 = arith.constant 0 : index
    %37 = vector.load %arg6[%c0_12, %c0_13] : memref<16x80xf32, #tpu.memory_space<vmem>>, vector<8x8xf32>
    tpu.vector_store %arg6[%c0_12, %c0_13], %36 {strides = array<i32>} : memref<16x80xf32, #tpu.memory_space<vmem>>, vector<8x8xf32>,
    %cst_14 = arith.constant 9.99999974E-6 : f32
    %38 = vector.broadcast %cst_14 : f32 to vector<8x1xf32>
    %39 = arith.addf %27, %38 : vector<8x1xf32>
    %40 = math.rsqrt %39 : vector<8x1xf32>
    %41 = vector.broadcast %40 : vector<8x1xf32> to vector<8x24xf32>
    %42 = arith.mulf %11, %41 : vector<8x24xf32>
    %43 = vector.broadcast %3 : vector<1x24xf32> to vector<8x24xf32>
    %44 = arith.mulf %42, %43 : vector<8x24xf32>
    %c0_15 = arith.constant 0 : index
    %c8_16 = arith.constant 8 : index
    %45 = vector.load %arg6[%c0_15, %c8_16] : memref<16x80xf32, #tpu.memory_space<vmem>>, vector<8x24xf32>
    tpu.vector_store %arg6[%c0_15, %c8_16], %44 {strides = array<i32>} : memref<16x80xf32, #tpu.memory_space<vmem>>, vector<8x24xf32>,
    %c0_17 = arith.constant 0 : index
    %c0_18 = arith.constant 0 : index
    %46 = vector.load %arg3[%c0_17, %c0_18] : memref<16x1xi32, #tpu.memory_space<vmem>>, vector<16x1xi32>
    %47 = tpu.iota {dimensions = array<i32: 1>} : vector<16x8xi32>
    %48 = vector.broadcast %46 : vector<16x1xi32> to vector<16x8xi32>
    %49 = arith.cmpi eq, %47, %48 : vector<16x8xi32>
    %50 = arith.extui %49 : vector<16x8xi1> to vector<16x8xi32>
    %51 = arith.sitofp %50 : vector<16x8xi32> to vector<16x8xf32>
    %c0_19 = arith.constant 0 : index
    %c0_20 = arith.constant 0 : index
    %52 = vector.load %arg6[%c0_19, %c0_20] : memref<16x80xf32, #tpu.memory_space<vmem>>, vector<8x32xf32>
    %cst_21 = arith.constant dense<0.000000e+00> : vector<16x32xf32>
    %53 = tpu.matmul %51, %52, %cst_21 {dimension_numbers = #tpu.dot_dimension_numbers<[1], [0], [0], [1], [0, 0, 1, 1], [], []>} : vector<16x8xf32>, vector<8x32xf32>, vector<16x32xf32> -> vector<16x32xf32>
    %c0_22 = arith.constant 0 : index
    %c0_23 = arith.constant 0 : index
    %54 = vector.load %arg2[%c0_22, %c0_23] : memref<16x19xf32, #tpu.memory_space<vmem>>, vector<16x16xf32>
    %c0_24 = arith.constant 0 : index
    %c16 = arith.constant 16 : index
    %55 = vector.load %arg2[%c0_24, %c16] : memref<16x19xf32, #tpu.memory_space<vmem>>, vector<16x3xf32>
    %56 = vector.extract_strided_slice %55 {offsets = [0, 0], sizes = [16, 1], strides = [1, 1]} : vector<16x3xf32> to vector<16x1xf32>
    %57 = vector.extract_strided_slice %55 {offsets = [0, 1], sizes = [16, 1], strides = [1, 1]} : vector<16x3xf32> to vector<16x1xf32>
    %58 = vector.extract_strided_slice %55 {offsets = [0, 2], sizes = [16, 1], strides = [1, 1]} : vector<16x3xf32> to vector<16x1xf32>
    %59 = arith.mulf %56, %56 : vector<16x1xf32>
    %60 = arith.mulf %57, %57 : vector<16x1xf32>
    %61 = arith.addf %59, %60 : vector<16x1xf32>
    %62 = arith.mulf %58, %58 : vector<16x1xf32>
    %63 = arith.addf %61, %62 : vector<16x1xf32>
    %cst_25 = arith.constant 9.99999996E-13 : f32
    %64 = vector.broadcast %cst_25 : f32 to vector<16x1xf32>
    %65 = arith.addf %63, %64 : vector<16x1xf32>
    %66 = math.rsqrt %65 : vector<16x1xf32>
    %67 = arith.mulf %56, %66 : vector<16x1xf32>
    %68 = arith.mulf %57, %66 : vector<16x1xf32>
    %69 = arith.mulf %58, %66 : vector<16x1xf32>
    %70 = math.absf %69 : vector<16x1xf32>
    %cst_26 = arith.constant 0.899999976 : f32
    %71 = vector.broadcast %cst_26 : f32 to vector<16x1xf32>
    %72 = arith.cmpf ogt, %70, %71 : vector<16x1xf32>
    %73 = arith.extui %72 : vector<16x1xi1> to vector<16x1xi32>
    %74 = arith.sitofp %73 : vector<16x1xi32> to vector<16x1xf32>
    %cst_27 = arith.constant 1.000000e+00 : f32
    %75 = vector.broadcast %cst_27 : f32 to vector<16x1xf32>
    %76 = arith.subf %75, %74 : vector<16x1xf32>
    %77 = arith.mulf %68, %76 : vector<16x1xf32>
    %78 = arith.mulf %69, %74 : vector<16x1xf32>
    %79 = arith.mulf %67, %76 : vector<16x1xf32>
    %80 = arith.subf %78, %79 : vector<16x1xf32>
    %cst_28 = arith.constant 0.000000e+00 : f32
    %81 = vector.broadcast %cst_28 : f32 to vector<16x1xf32>
    %82 = arith.subf %81, %68 : vector<16x1xf32>
    %83 = arith.mulf %82, %74 : vector<16x1xf32>
    %84 = arith.mulf %77, %77 : vector<16x1xf32>
    %85 = arith.mulf %80, %80 : vector<16x1xf32>
    %86 = arith.addf %84, %85 : vector<16x1xf32>
    %87 = arith.mulf %83, %83 : vector<16x1xf32>
    %88 = arith.addf %86, %87 : vector<16x1xf32>
    %cst_29 = arith.constant 9.99999996E-13 : f32
    %89 = vector.broadcast %cst_29 : f32 to vector<16x1xf32>
    %90 = arith.addf %88, %89 : vector<16x1xf32>
    %91 = math.rsqrt %90 : vector<16x1xf32>
    %92 = arith.mulf %77, %91 : vector<16x1xf32>
    %93 = arith.mulf %80, %91 : vector<16x1xf32>
    %94 = arith.mulf %83, %91 : vector<16x1xf32>
    %95 = arith.mulf %68, %94 : vector<16x1xf32>
    %96 = arith.mulf %69, %93 : vector<16x1xf32>
    %97 = arith.subf %95, %96 : vector<16x1xf32>
    %98 = arith.mulf %69, %92 : vector<16x1xf32>
    %99 = arith.mulf %67, %94 : vector<16x1xf32>
    %100 = arith.subf %98, %99 : vector<16x1xf32>
    %101 = arith.mulf %67, %93 : vector<16x1xf32>
    %102 = arith.mulf %68, %92 : vector<16x1xf32>
    %103 = arith.subf %101, %102 : vector<16x1xf32>
    %104 = vector.shape_cast %92 : vector<16x1xf32> to vector<16x1xf32>
    %105 = vector.broadcast %104 : vector<16x1xf32> to vector<16x8xf32>
    %106 = vector.shape_cast %93 : vector<16x1xf32> to vector<16x1xf32>
    %107 = vector.broadcast %106 : vector<16x1xf32> to vector<16x8xf32>
    %108 = vector.shape_cast %94 : vector<16x1xf32> to vector<16x1xf32>
    %109 = vector.broadcast %108 : vector<16x1xf32> to vector<16x8xf32>
    %110 = vector.shape_cast %97 : vector<16x1xf32> to vector<16x1xf32>
    %111 = vector.broadcast %110 : vector<16x1xf32> to vector<16x8xf32>
    %112 = vector.shape_cast %100 : vector<16x1xf32> to vector<16x1xf32>
    %113 = vector.broadcast %112 : vector<16x1xf32> to vector<16x8xf32>
    %114 = vector.shape_cast %103 : vector<16x1xf32> to vector<16x1xf32>
    %115 = vector.broadcast %114 : vector<16x1xf32> to vector<16x8xf32>
    %116 = vector.shape_cast %67 : vector<16x1xf32> to vector<16x1xf32>
    %117 = vector.broadcast %116 : vector<16x1xf32> to vector<16x8xf32>
    %118 = vector.shape_cast %68 : vector<16x1xf32> to vector<16x1xf32>
    %119 = vector.broadcast %118 : vector<16x1xf32> to vector<16x8xf32>
    %120 = vector.shape_cast %69 : vector<16x1xf32> to vector<16x1xf32>
    %121 = vector.broadcast %120 : vector<16x1xf32> to vector<16x8xf32>
    %c0_30 = arith.constant 0 : index
    %c0_31 = arith.constant 0 : index
    %122 = vector.load %arg1[%c0_30, %c0_31] : memref<16x32xf32, #tpu.memory_space<vmem>>, vector<16x32xf32>
    %123 = vector.extract_strided_slice %53 {offsets = [0, 8], sizes = [16, 8], strides = [1, 1]} : vector<16x32xf32> to vector<16x8xf32>
    %124 = vector.extract_strided_slice %53 {offsets = [0, 16], sizes = [16, 8], strides = [1, 1]} : vector<16x32xf32> to vector<16x8xf32>
    %125 = vector.extract_strided_slice %53 {offsets = [0, 24], sizes = [16, 8], strides = [1, 1]} : vector<16x32xf32> to vector<16x8xf32>
    %126 = vector.extract_strided_slice %122 {offsets = [0, 8], sizes = [16, 8], strides = [1, 1]} : vector<16x32xf32> to vector<16x8xf32>
    %127 = vector.extract_strided_slice %122 {offsets = [0, 16], sizes = [16, 8], strides = [1, 1]} : vector<16x32xf32> to vector<16x8xf32>
    %128 = vector.extract_strided_slice %122 {offsets = [0, 24], sizes = [16, 8], strides = [1, 1]} : vector<16x32xf32> to vector<16x8xf32>
    %129 = vector.extract_strided_slice %53 {offsets = [0, 0], sizes = [16, 8], strides = [1, 1]} : vector<16x32xf32> to vector<16x8xf32>
    %c0_32 = arith.constant 0 : index
    %c0_33 = arith.constant 0 : index
    %130 = vector.load %arg6[%c0_32, %c0_33] : memref<16x80xf32, #tpu.memory_space<vmem>>, vector<16x8xf32>
    tpu.vector_store %arg6[%c0_32, %c0_33], %129 {strides = array<i32>} : memref<16x80xf32, #tpu.memory_space<vmem>>, vector<16x8xf32>,
    %131 = vector.extract_strided_slice %122 {offsets = [0, 0], sizes = [16, 8], strides = [1, 1]} : vector<16x32xf32> to vector<16x8xf32>
    %c0_34 = arith.constant 0 : index
    %c8_35 = arith.constant 8 : index
    %132 = vector.load %arg6[%c0_34, %c8_35] : memref<16x80xf32, #tpu.memory_space<vmem>>, vector<16x8xf32>
    tpu.vector_store %arg6[%c0_34, %c8_35], %131 {strides = array<i32>} : memref<16x80xf32, #tpu.memory_space<vmem>>, vector<16x8xf32>,
    %133 = arith.mulf %117, %123 : vector<16x8xf32>
    %134 = arith.mulf %119, %124 : vector<16x8xf32>
    %135 = arith.addf %133, %134 : vector<16x8xf32>
    %136 = arith.mulf %121, %125 : vector<16x8xf32>
    %137 = arith.addf %135, %136 : vector<16x8xf32>
    %c0_36 = arith.constant 0 : index
    %c16_37 = arith.constant 16 : index
    %138 = vector.load %arg6[%c0_36, %c16_37] : memref<16x80xf32, #tpu.memory_space<vmem>>, vector<16x8xf32>
    tpu.vector_store %arg6[%c0_36, %c16_37], %137 {strides = array<i32>} : memref<16x80xf32, #tpu.memory_space<vmem>>, vector<16x8xf32>,
    %139 = arith.mulf %117, %126 : vector<16x8xf32>
    %140 = arith.mulf %119, %127 : vector<16x8xf32>
    %141 = arith.addf %139, %140 : vector<16x8xf32>
    %142 = arith.mulf %121, %128 : vector<16x8xf32>
    %143 = arith.addf %141, %142 : vector<16x8xf32>
    %c0_38 = arith.constant 0 : index
    %c24 = arith.constant 24 : index
    %144 = vector.load %arg6[%c0_38, %c24] : memref<16x80xf32, #tpu.memory_space<vmem>>, vector<16x8xf32>
    tpu.vector_store %arg6[%c0_38, %c24], %143 {strides = array<i32>} : memref<16x80xf32, #tpu.memory_space<vmem>>, vector<16x8xf32>,
    %145 = arith.mulf %105, %123 : vector<16x8xf32>
    %146 = arith.mulf %107, %124 : vector<16x8xf32>
    %147 = arith.addf %145, %146 : vector<16x8xf32>
    %148 = arith.mulf %109, %125 : vector<16x8xf32>
    %149 = arith.addf %147, %148 : vector<16x8xf32>
    %c0_39 = arith.constant 0 : index
    %c32 = arith.constant 32 : index
    %150 = vector.load %arg6[%c0_39, %c32] : memref<16x80xf32, #tpu.memory_space<vmem>>, vector<16x8xf32>
    tpu.vector_store %arg6[%c0_39, %c32], %149 {strides = array<i32>} : memref<16x80xf32, #tpu.memory_space<vmem>>, vector<16x8xf32>,
    %151 = arith.mulf %105, %126 : vector<16x8xf32>
    %152 = arith.mulf %107, %127 : vector<16x8xf32>
    %153 = arith.addf %151, %152 : vector<16x8xf32>
    %154 = arith.mulf %109, %128 : vector<16x8xf32>
    %155 = arith.addf %153, %154 : vector<16x8xf32>
    %c0_40 = arith.constant 0 : index
    %c40 = arith.constant 40 : index
    %156 = vector.load %arg6[%c0_40, %c40] : memref<16x80xf32, #tpu.memory_space<vmem>>, vector<16x8xf32>
    tpu.vector_store %arg6[%c0_40, %c40], %155 {strides = array<i32>} : memref<16x80xf32, #tpu.memory_space<vmem>>, vector<16x8xf32>,
    %157 = arith.mulf %111, %123 : vector<16x8xf32>
    %158 = arith.mulf %113, %124 : vector<16x8xf32>
    %159 = arith.addf %157, %158 : vector<16x8xf32>
    %160 = arith.mulf %115, %125 : vector<16x8xf32>
    %161 = arith.addf %159, %160 : vector<16x8xf32>
    %c0_41 = arith.constant 0 : index
    %c48 = arith.constant 48 : index
    %162 = vector.load %arg6[%c0_41, %c48] : memref<16x80xf32, #tpu.memory_space<vmem>>, vector<16x8xf32>
    tpu.vector_store %arg6[%c0_41, %c48], %161 {strides = array<i32>} : memref<16x80xf32, #tpu.memory_space<vmem>>, vector<16x8xf32>,
    %163 = arith.mulf %111, %126 : vector<16x8xf32>
    %164 = arith.mulf %113, %127 : vector<16x8xf32>
    %165 = arith.addf %163, %164 : vector<16x8xf32>
    %166 = arith.mulf %115, %128 : vector<16x8xf32>
    %167 = arith.addf %165, %166 : vector<16x8xf32>
    %c0_42 = arith.constant 0 : index
    %c56 = arith.constant 56 : index
    %168 = vector.load %arg6[%c0_42, %c56] : memref<16x80xf32, #tpu.memory_space<vmem>>, vector<16x8xf32>
    tpu.vector_store %arg6[%c0_42, %c56], %167 {strides = array<i32>} : memref<16x80xf32, #tpu.memory_space<vmem>>, vector<16x8xf32>,
    %c0_43 = arith.constant 0 : index
    %c64 = arith.constant 64 : index
    %169 = vector.load %arg6[%c0_43, %c64] : memref<16x80xf32, #tpu.memory_space<vmem>>, vector<16x16xf32>
    tpu.vector_store %arg6[%c0_43, %c64], %54 {strides = array<i32>} : memref<16x80xf32, #tpu.memory_space<vmem>>, vector<16x16xf32>,
    %c0_44 = arith.constant 0 : index
    %c0_45 = arith.constant 0 : index
    %170 = vector.load %arg6[%c0_44, %c0_45] : memref<16x80xf32, #tpu.memory_space<vmem>>, vector<16x80xf32>
    %cst_46 = arith.constant dense<0.000000e+00> : vector<16x56xf32>
    %171 = tpu.matmul %170, %6, %cst_46 {dimension_numbers = #tpu.dot_dimension_numbers<[1], [0], [0], [1], [0, 0, 1, 1], [], []>} : vector<16x80xf32>, vector<80x56xf32>, vector<16x56xf32> -> vector<16x56xf32>
    %172 = vector.extract_strided_slice %171 {offsets = [0, 0], sizes = [16, 8], strides = [1, 1]} : vector<16x56xf32> to vector<16x8xf32>
    %173 = vector.extract_strided_slice %171 {offsets = [0, 8], sizes = [16, 24], strides = [1, 1]} : vector<16x56xf32> to vector<16x24xf32>
    %174 = arith.negf %173 : vector<16x24xf32>
    %175 = math.exp %174 : vector<16x24xf32>
    %cst_47 = arith.constant 1.000000e+00 : f32
    %176 = vector.broadcast %cst_47 : f32 to vector<16x24xf32>
    %177 = arith.addf %176, %175 : vector<16x24xf32>
    %178 = arith.divf %176, %177 : vector<16x24xf32>
    %179 = arith.negf %172 : vector<16x8xf32>
    %180 = math.exp %179 : vector<16x8xf32>
    %cst_48 = arith.constant 1.000000e+00 : f32
    %181 = vector.broadcast %cst_48 : f32 to vector<16x8xf32>
    %182 = arith.addf %181, %180 : vector<16x8xf32>
    %183 = arith.divf %181, %182 : vector<16x8xf32>
    %184 = arith.mulf %172, %183 : vector<16x8xf32>
    %c0_49 = arith.constant 0 : index
    %c0_50 = arith.constant 0 : index
    %185 = vector.load %arg6[%c0_49, %c0_50] : memref<16x80xf32, #tpu.memory_space<vmem>>, vector<16x8xf32>
    tpu.vector_store %arg6[%c0_49, %c0_50], %184 {strides = array<i32>} : memref<16x80xf32, #tpu.memory_space<vmem>>, vector<16x8xf32>,
    %186 = vector.extract_strided_slice %171 {offsets = [0, 32], sizes = [16, 24], strides = [1, 1]} : vector<16x56xf32> to vector<16x24xf32>
    %187 = arith.mulf %186, %178 : vector<16x24xf32>
    %c0_51 = arith.constant 0 : index
    %c8_52 = arith.constant 8 : index
    %188 = vector.load %arg6[%c0_51, %c8_52] : memref<16x80xf32, #tpu.memory_space<vmem>>, vector<16x24xf32>
    tpu.vector_store %arg6[%c0_51, %c8_52], %187 {strides = array<i32>} : memref<16x80xf32, #tpu.memory_space<vmem>>, vector<16x24xf32>,
    %c0_53 = arith.constant 0 : index
    %c32_54 = arith.constant 32 : index
    %189 = vector.load %arg6[%c0_53, %c32_54] : memref<16x80xf32, #tpu.memory_space<vmem>>, vector<16x16xf32>
    tpu.vector_store %arg6[%c0_53, %c32_54], %54 {strides = array<i32>} : memref<16x80xf32, #tpu.memory_space<vmem>>, vector<16x16xf32>,
    %c0_55 = arith.constant 0 : index
    %c0_56 = arith.constant 0 : index
    %190 = vector.load %arg6[%c0_55, %c0_56] : memref<16x80xf32, #tpu.memory_space<vmem>>, vector<16x48xf32>
    %cst_57 = arith.constant dense<0.000000e+00> : vector<16x64xf32>
    %191 = tpu.matmul %190, %7, %cst_57 {dimension_numbers = #tpu.dot_dimension_numbers<[1], [0], [0], [1], [0, 0, 1, 1], [], []>} : vector<16x48xf32>, vector<48x64xf32>, vector<16x64xf32> -> vector<16x64xf32>
    %192 = vector.extract_strided_slice %191 {offsets = [0, 0], sizes = [16, 8], strides = [1, 1]} : vector<16x64xf32> to vector<16x8xf32>
    %193 = vector.broadcast %4 : vector<1x8xf32> to vector<16x8xf32>
    %194 = arith.addf %192, %193 : vector<16x8xf32>
    %195 = vector.extract_strided_slice %191 {offsets = [0, 32], sizes = [16, 8], strides = [1, 1]} : vector<16x64xf32> to vector<16x8xf32>
    %196 = arith.mulf %194, %195 : vector<16x8xf32>
    %197 = vector.extract_strided_slice %191 {offsets = [0, 8], sizes = [16, 24], strides = [1, 1]} : vector<16x64xf32> to vector<16x24xf32>
    %198 = vector.extract_strided_slice %191 {offsets = [0, 40], sizes = [16, 24], strides = [1, 1]} : vector<16x64xf32> to vector<16x24xf32>
    %199 = arith.mulf %197, %198 : vector<16x24xf32>
    %200 = vector.extract_strided_slice %199 {offsets = [0, 0], sizes = [16, 8], strides = [1, 1]} : vector<16x24xf32> to vector<16x8xf32>
    %201 = vector.extract_strided_slice %199 {offsets = [0, 8], sizes = [16, 8], strides = [1, 1]} : vector<16x24xf32> to vector<16x8xf32>
    %202 = vector.extract_strided_slice %199 {offsets = [0, 16], sizes = [16, 8], strides = [1, 1]} : vector<16x24xf32> to vector<16x8xf32>
    %c0_58 = arith.constant 0 : index
    %c0_59 = arith.constant 0 : index
    %203 = vector.load %arg6[%c0_58, %c0_59] : memref<16x80xf32, #tpu.memory_space<vmem>>, vector<16x8xf32>
    tpu.vector_store %arg6[%c0_58, %c0_59], %196 {strides = array<i32>} : memref<16x80xf32, #tpu.memory_space<vmem>>, vector<16x8xf32>,
    %204 = arith.mulf %105, %201 : vector<16x8xf32>
    %205 = arith.mulf %111, %202 : vector<16x8xf32>
    %206 = arith.addf %204, %205 : vector<16x8xf32>
    %207 = arith.mulf %117, %200 : vector<16x8xf32>
    %208 = arith.addf %206, %207 : vector<16x8xf32>
    %c0_60 = arith.constant 0 : index
    %c8_61 = arith.constant 8 : index
    %209 = vector.load %arg6[%c0_60, %c8_61] : memref<16x80xf32, #tpu.memory_space<vmem>>, vector<16x8xf32>
    tpu.vector_store %arg6[%c0_60, %c8_61], %208 {strides = array<i32>} : memref<16x80xf32, #tpu.memory_space<vmem>>, vector<16x8xf32>,
    %210 = arith.mulf %107, %201 : vector<16x8xf32>
    %211 = arith.mulf %113, %202 : vector<16x8xf32>
    %212 = arith.addf %210, %211 : vector<16x8xf32>
    %213 = arith.mulf %119, %200 : vector<16x8xf32>
    %214 = arith.addf %212, %213 : vector<16x8xf32>
    %c0_62 = arith.constant 0 : index
    %c16_63 = arith.constant 16 : index
    %215 = vector.load %arg6[%c0_62, %c16_63] : memref<16x80xf32, #tpu.memory_space<vmem>>, vector<16x8xf32>
    tpu.vector_store %arg6[%c0_62, %c16_63], %214 {strides = array<i32>} : memref<16x80xf32, #tpu.memory_space<vmem>>, vector<16x8xf32>,
    %216 = arith.mulf %109, %201 : vector<16x8xf32>
    %217 = arith.mulf %115, %202 : vector<16x8xf32>
    %218 = arith.addf %216, %217 : vector<16x8xf32>
    %219 = arith.mulf %121, %200 : vector<16x8xf32>
    %220 = arith.addf %218, %219 : vector<16x8xf32>
    %c0_64 = arith.constant 0 : index
    %c24_65 = arith.constant 24 : index
    %221 = vector.load %arg6[%c0_64, %c24_65] : memref<16x80xf32, #tpu.memory_space<vmem>>, vector<16x8xf32>
    tpu.vector_store %arg6[%c0_64, %c24_65], %220 {strides = array<i32>} : memref<16x80xf32, #tpu.memory_space<vmem>>, vector<16x8xf32>,
    %c0_66 = arith.constant 0 : index
    %c0_67 = arith.constant 0 : index
    %222 = vector.load %arg6[%c0_66, %c0_67] : memref<16x80xf32, #tpu.memory_space<vmem>>, vector<16x32xf32>
    %cst_68 = arith.constant dense<0.000000e+00> : vector<8x32xf32>
    %223 = tpu.matmul %51, %222, %cst_68 {dimension_numbers = #tpu.dot_dimension_numbers<[0], [0], [1], [1], [0, 1, 1, 1], [], []>} : vector<16x8xf32>, vector<16x32xf32>, vector<8x32xf32> -> vector<8x32xf32>
    %cst_69 = arith.constant dense<0.000000e+00> : vector<8x32xf32>
    %224 = tpu.matmul %9, %8, %cst_69 {dimension_numbers = #tpu.dot_dimension_numbers<[1], [0], [0], [1], [0, 0, 1, 1], [], []>} : vector<8x32xf32>, vector<32x32xf32>, vector<8x32xf32> -> vector<8x32xf32>
    %225 = vector.broadcast %5 : vector<1x32xf32> to vector<8x32xf32>
    %226 = arith.addf %224, %225 : vector<8x32xf32>
    %227 = arith.addf %223, %226 : vector<8x32xf32>
    %c0_70 = arith.constant 0 : index
    %c0_71 = arith.constant 0 : index
    %228 = vector.load %arg5[%c0_70, %c0_71] : memref<8x32xf32, #tpu.memory_space<vmem>>, vector<8x32xf32>
    tpu.vector_store %arg5[%c0_70, %c0_71], %227 {strides = array<i32>} : memref<8x32xf32, #tpu.memory_space<vmem>>, vector<8x32xf32>,
    return
  }
}

</mosaic_0001>

<llo_original>
// kernel: update_node_forward.1
$region0: #{update_node_forward.1}
  #allocation0 [shape = 'u32[]', space=smem, size = 0x4, offset = 0x4, fixed_abs, tag = 'smem constant byte address 0x4 - core index']
  #allocation1 [shape = 'u32[72,128]{1,0:T(1,128)}', space=vmem, size = 0x9000, scoped, tag = 'internal scratch']
  #allocation2 [shape = 'f32[16,80]{1,0:T(8,128)}', space=vmem, size = 0x2000, scoped, tag = 'scratch operand']
  %s0 = inlined_call_operand.vmem [shape: f32[8,32], index: 0, kind: input, shape index: {}]
  %s1 = inlined_call_operand.vmem [shape: f32[16,32], index: 1, kind: input, shape index: {}]
  %s2 = inlined_call_operand.vmem [shape: f32[16,19], index: 2, kind: input, shape index: {}]
  %s3 = inlined_call_operand.vmem [shape: s32[16,1], index: 3, kind: input, shape index: {}]
  %s4 = inlined_call_operand.vmem [shape: f32[168,80], index: 4, kind: input, shape index: {}]
  %s5 = inlined_call_operand.hbm [shape: f32[8,32], index: 5, kind: output, shape index: {}]
  %s6 = sld [smem:[#allocation0]]
  $region30: #{update_node_forward.1} parent=0
    _
  %s8 = ssub.s32 1, %s6
  %s9 = scalar_select 0, %s8, %s6
  $region1: #{update_node_forward.1} parent=0
    #allocation3 [shape = 'u8[4096]{0}', space=vmem, size = 0x1000, scoped, tag = 'output window, operand 0, single buffered']
    #allocation4 [shape = 's32[1]{0}', space=sflag, size = 0x4, scoped, tag = 'scoped memory for update_node_forward.1']
    %10 = vsyncpa [#allocation4], 0
    // Predicated region
    $region2: #{update_node_forward.1} parent=1 // pred_check
      _
    $region3: #{update_node_forward.1} parent=1 // pred_check_branch
      %12 = sbr.rel (0) target = $region5
    $region4: #{update_node_forward.1} parent=1 // pred_region
      _
    $region5: #{update_node_forward.1} parent=1 // pred_fallthru
      _
    // Predicated region
    $region6: #{update_node_forward.1} parent=1 // pred_check
      _
    $region7: #{update_node_forward.1} parent=1 // pred_check_branch
      %14 = sbr.rel (0) target = $region9
    $region8: #{update_node_forward.1} parent=1 // pred_region
      _
    $region9: #{update_node_forward.1} parent=1 // pred_fallthru
      _
    // Predicated region
    $region10: #{update_node_forward.1} parent=1 // pred_check
      _
    $region11: #{update_node_forward.1} parent=1 // pred_check_branch
      %16 = sbr.rel (0) target = $region13
    $region12: #{update_node_forward.1} parent=1 // pred_region
      _
    $region13: #{update_node_forward.1} parent=1 // pred_fallthru
      _
    // Predicated region
    $region14: #{update_node_forward.1} parent=1 // pred_check
      _
    $region15: #{update_node_forward.1} parent=1 // pred_check_branch
      %18 = sbr.rel (0) target = $region17
    $region16: #{update_node_forward.1} parent=1 // pred_region
      _
    $region17: #{update_node_forward.1} parent=1 // pred_fallthru
      _
    // Predicated region
    $region18: #{update_node_forward.1} parent=1 // pred_check
      _
    $region19: #{update_node_forward.1} parent=1 // pred_check_branch
      %20 = sbr.rel (0) target = $region21
    $region20: #{update_node_forward.1} parent=1 // pred_region
      _
    $region21: #{update_node_forward.1} parent=1 // pred_fallthru
      _
    %v21 = vld [vmem:[%s4] sm:$0x1]
    %v22 = vld [vmem:[%s4 + $0x8] sm:$0xff]
    %v23 = vld [vmem:[%s4 + $0x10] sm:$0xff]
    %v24 = vld [vmem:[%s4 + $0x18] sm:$0xff]
    %v25 = vld [vmem:[%s4 + $0x20] sm:$0xff]
    %v26 = vld [vmem:[%s4 + $0x28] sm:$0xff]
    %v27 = vld [vmem:[%s4 + $0x30] sm:$0xff]
    %v28 = vld [vmem:[%s4 + $0x38] sm:$0xff]
    %v29 = vld [vmem:[%s4 + $0x40] sm:$0xff]
    %v30 = vld [vmem:[%s4 + $0x48] sm:$0xff]
    %v31 = vld [vmem:[%s4 + $0x50] sm:$0xff]
    %v32 = vld [vmem:[%s4 + $0x58] sm:$0xff]
    %v33 = vld [vmem:[%s4 + $0x60] sm:$0xff]
    %v34 = vld [vmem:[%s4 + $0x68] sm:$0xff]
    %v35 = vld [vmem:[%s4 + $0x70] sm:$0xff]
    %v36 = vld [vmem:[%s4 + $0x78] sm:$0xff]
    %v37 = vld [vmem:[%s4 + $0x80] sm:$0xff]
    %v38 = vld [vmem:[%s4 + $0x88] sm:$0xff]
    %v39 = vld [vmem:[%s4 + $0x90] sm:$0xff]
    %v40 = vld [vmem:[%s4 + $0x98] sm:$0xff]
    %v41 = vld [vmem:[%s4 + $0xa0] sm:$0xff]
    %v42 = vld [vmem:[%s0] sm:$0xff]
    %vm43 = vcmask 64512
    %v44 = vsel %vm43, %v42, 0.0
    %45 = vadd.xlane.f32.xlu0 %v44
    %v46 = vpop.xlane.xlu0 %45
    %v47 = vrcp.pop 8.0
    %v48 = vmul.f32 8.0, %v47
    %v49 = vsub.f32 1.0, %v48
    %v50 = vmul.f32 %v47, %v49
    %v51 = vadd.f32 %v47, %v50
    %vm52 = vweird.f32 %v47
    %v53 = vsel %vm52, %v47, %v51
    %v54 = vmul.f32 %v46, %v53
    %v55 = vsub.f32 %v42, %v54
    %v56 = vmul.f32 %v55, %v55
    %v57 = vsel %vm43, %v56, 0.0
    %58 = vadd.xlane.f32.xlu0 %v57
    %v59 = vpop.xlane.xlu0 %58
    %v60 = vmul.f32 %v59, %v53
    %v61 = vmul.f32 %v42, %v42
    %63 = vrot.lane.b32.xlu0 %v61, 120
    %v64 = vpop.permute.xlu0 %63
    %vm66 = vcmask 195584
    %v67 = vsel %vm66, %v64, 0.0
    %68 = vadd.xlane.f32.xlu0 %v67
    %v69 = vpop.xlane.xlu0 %68
    %v70 = vrcp.pop 24.0
    %v71 = vmul.f32 24.0, %v70
    %v72 = vsub.f32 1.0, %v71
    %v73 = vmul.f32 %v70, %v72
    %v74 = vadd.f32 %v70, %v73
    %vm75 = vweird.f32 %v70
    %v76 = vsel %vm75, %v70, %v74
    %v77 = vmul.f32 %v69, %v76
    %v78 = vadd.f32 %v60, 1e-05
    %v79 = vrsqrt.pop %v78
    %v80 = vmul.f32 %v79, %v78
    %v81 = vmul.f32 %v80, %v79
    %v82 = vmul.f32 0.5, %v81
    %v83 = vsub.f32 1.5, %v82
    %v84 = vmul.f32 %v79, %v83
    %vm85 = vweird.f32 %v78
    %vm86 = vweird.f32 %v79
    %vm87 = vmor %vm85, %vm86
    %v88 = vsel %vm87, %v79, %v84
    %v89 = vmul.f32 %v55, %v88
    %v90 = vperm.slane %v21, 0
    %v91 = vmul.f32 %v89, %v90
    %93 = vrot.lane.b32.xlu0 %v90, 120
    %v94 = vpop.permute.xlu0 %93
    %v96 = vadd.f32 %v91, %v94
    %97 = vst.msk [vmem:[#allocation2] sm:$0xff] %vm43, %v96
    %v98 = vadd.f32 %v77, 1e-05
    %v99 = vrsqrt.pop %v98
    %v100 = vmul.f32 %v99, %v98
    %v101 = vmul.f32 %v100, %v99
    %v102 = vmul.f32 0.5, %v101
    %v103 = vsub.f32 1.5, %v102
    %v104 = vmul.f32 %v99, %v103
    %vm105 = vweird.f32 %v98
    %vm106 = vweird.f32 %v99
    %vm107 = vmor %vm105, %vm106
    %v108 = vsel %vm107, %v99, %v104
    %v109 = vmul.f32 %v42, %v108
    %v110 = vmul.f32 %v109, %v94
    %vm111 = vcmask 261184
    %112 = vst.msk [vmem:[#allocation2] sm:$0xff] %vm111, %v110
    %v113 = vld [vmem:[%s3] sm:$0xff]
    %v114 = vld [vmem:[%s3 + $0x8] sm:$0xff]
    %v115 = vlaneseq
    %v116 = vand.u32 %v115, 127
    %117 = vset.pattern.permute.xlu0 0
    %118 = vperm.xlu0 %117, %v113
    %v119 = vpop.permute.xlu0 %118
    %120 = vset.pattern.permute.xlu0 0
    %121 = vperm.xlu0 %120, %v114
    %v122 = vpop.permute.xlu0 %121
    %vm123 = vcmp.eq.s32.totalorder %v116, %v119
    %vm124 = vcmp.eq.s32.totalorder %v116, %v122
    %v125 = vsel %vm123, 1, 0
    %v126 = vsel %vm124, 1, 0
    %v127 = vcvt.s32.f32 %v125
    %v128 = vcvt.s32.f32 %v126
    %v129 = vld [vmem:[#allocation2] sm:$0xff]
    %v131 = vsel %vm43, %v127, 0
    %v134 = vsel %vm43, %v128, 0
    %136 = vmatpush.msra.mxu0 0.0
    %137 = vmatpush.msra.mxu0 0.0
    %138 = vmatpush.msra.mxu0 0.0
    %139 = vmatpush.msra.mxu0 0.0
    %140 = vmatpush.msra.mxu0 0.0
    %141 = vmatpush.msra.mxu0 0.0
    %142 = vmatpush.msra.mxu0 0.0
    %143 = vmatpush.msra.mxu0 0.0
    %144 = vmatpush.msra.mxu0 0.0
    %145 = vmatpush.msra.mxu0 0.0
    %146 = vmatpush.msra.mxu0 0.0
    %147 = vmatpush.msra.mxu0 0.0
    %148 = vmatpush.msra.mxu0 0.0
    %149 = vmatpush.msra.mxu0 0.0
    %150 = vmatpush.msra.mxu0 0.0
    %151 = vmatpush.msra.mxu0 %v129
    %152 = vmatmul.f32.gmra.mxu0 %v131
    %v153 = vpop.f32.mrf.mxu0
    %v154 = vadd.f32 0.0, %v153
    %155 = vmatmul.f32.gmra.mxu0 %v134
    %v156 = vpop.f32.mrf.mxu0
    %v157 = vadd.f32 0.0, %v156
    %158 = vdwg.mxu0
    %v159 = vld [vmem:[%s2] sm:$0xff]
    %v160 = vld [vmem:[%s2 + $0x8] sm:$0xff]
    %v161 = vmul.f32 %v159, %v159
    %v162 = vmul.f32 %v160, %v160
    %165 = vrot.lane.b32.xlu0 %v161, 127
    %v166 = vpop.permute.xlu0 %165
    %167 = vrot.lane.b32.xlu0 %v162, 127
    %v168 = vpop.permute.xlu0 %167
    %v171 = vadd.f32 %v161, %v166
    %v172 = vadd.f32 %v162, %v168
    %173 = vrot.lane.b32.xlu0 %v161, 126
    %v174 = vpop.permute.xlu0 %173
    %175 = vrot.lane.b32.xlu0 %v162, 126
    %v176 = vpop.permute.xlu0 %175
    %v179 = vadd.f32 %v171, %v174
    %v180 = vadd.f32 %v172, %v176
    %v181 = vadd.f32 %v179, 1e-12
    %v182 = vadd.f32 %v180, 1e-12
    %v183 = vrsqrt.pop %v181
    %v184 = vmul.f32 %v183, %v181
    %v185 = vmul.f32 %v184, %v183
    %v186 = vmul.f32 0.5, %v185
    %v187 = vsub.f32 1.5, %v186
    %v188 = vmul.f32 %v183, %v187
    %vm189 = vweird.f32 %v181
    %vm190 = vweird.f32 %v183
    %vm191 = vmor %vm189, %vm190
    %v192 = vsel %vm191, %v183, %v188
    %v193 = vrsqrt.pop %v182
    %v194 = vmul.f32 %v193, %v182
    %v195 = vmul.f32 %v194, %v193
    %v196 = vmul.f32 0.5, %v195
    %v197 = vsub.f32 1.5, %v196
    %v198 = vmul.f32 %v193, %v197
    %vm199 = vweird.f32 %v182
    %vm200 = vweird.f32 %v193
    %vm201 = vmor %vm199, %vm200
    %v202 = vsel %vm201, %v193, %v198
    %v203 = vmul.f32 %v159, %v192
    %v204 = vmul.f32 %v160, %v202
    %207 = vrot.lane.b32.xlu0 %v192, 1
    %v208 = vpop.permute.xlu0 %207
    %209 = vrot.lane.b32.xlu0 %v202, 1
    %v210 = vpop.permute.xlu0 %209
    %v213 = vmul.f32 %v159, %v208
    %v214 = vmul.f32 %v160, %v210
    %215 = vrot.lane.b32.xlu0 %v192, 2
    %v216 = vpop.permute.xlu0 %215
    %217 = vrot.lane.b32.xlu0 %v202, 2
    %v218 = vpop.permute.xlu0 %217
    %v221 = vmul.f32 %v159, %v216
    %v222 = vmul.f32 %v160, %v218
    %v223 = vand.u32 2147483647, %v221
    %v224 = vand.u32 2147483647, %v222
    %vm225 = vcmp.gt.f32.partialorder %v223, 0.9
    %vm226 = vcmp.gt.f32.partialorder %v224, 0.9
    %v227 = vsel %vm225, 1, 0
    %v228 = vsel %vm226, 1, 0
    %v229 = vcvt.s32.f32 %v227
    %v230 = vcvt.s32.f32 %v228
    %v231 = vsub.f32 1.0, %v229
    %v232 = vsub.f32 1.0, %v230
    %235 = vrot.lane.b32.xlu0 %v231, 127
    %v236 = vpop.permute.xlu0 %235
    %237 = vrot.lane.b32.xlu0 %v232, 127
    %v238 = vpop.permute.xlu0 %237
    %v241 = vmul.f32 %v213, %v236
    %v242 = vmul.f32 %v214, %v238
    %v243 = vmul.f32 %v221, %v229
    %v244 = vmul.f32 %v222, %v230
    %245 = vrot.lane.b32.xlu0 %v231, 126
    %v246 = vpop.permute.xlu0 %245
    %247 = vrot.lane.b32.xlu0 %v232, 126
    %v248 = vpop.permute.xlu0 %247
    %v251 = vmul.f32 %v203, %v246
    %v252 = vmul.f32 %v204, %v248
    %255 = vrot.lane.b32.xlu0 %v251, 2
    %v256 = vpop.permute.xlu0 %255
    %257 = vrot.lane.b32.xlu0 %v252, 2
    %v258 = vpop.permute.xlu0 %257
    %v261 = vsub.f32 %v243, %v256
    %v262 = vsub.f32 %v244, %v258
    %v263 = vsub.f32 0.0, %v213
    %v264 = vsub.f32 0.0, %v214
    %267 = vrot.lane.b32.xlu0 %v229, 127
    %v268 = vpop.permute.xlu0 %267
    %269 = vrot.lane.b32.xlu0 %v230, 127
    %v270 = vpop.permute.xlu0 %269
    %v273 = vmul.f32 %v263, %v268
    %v274 = vmul.f32 %v264, %v270
    %v275 = vmul.f32 %v241, %v241
    %v276 = vmul.f32 %v242, %v242
    %v277 = vmul.f32 %v261, %v261
    %v278 = vmul.f32 %v262, %v262
    %281 = vrot.lane.b32.xlu0 %v277, 127
    %v282 = vpop.permute.xlu0 %281
    %283 = vrot.lane.b32.xlu0 %v278, 127
    %v284 = vpop.permute.xlu0 %283
    %v287 = vadd.f32 %v275, %v282
    %v288 = vadd.f32 %v276, %v284
    %v289 = vmul.f32 %v273, %v273
    %v290 = vmul.f32 %v274, %v274
    %v291 = vadd.f32 %v287, %v289
    %v292 = vadd.f32 %v288, %v290
    %v293 = vadd.f32 %v291, 1e-12
    %v294 = vadd.f32 %v292, 1e-12
    %v295 = vrsqrt.pop %v293
    %v296 = vmul.f32 %v295, %v293
    %v297 = vmul.f32 %v296, %v295
    %v298 = vmul.f32 0.5, %v297
    %v299 = vsub.f32 1.5, %v298
    %v300 = vmul.f32 %v295, %v299
    %vm301 = vweird.f32 %v293
    %vm302 = vweird.f32 %v295
    %vm303 = vmor %vm301, %vm302
    %v304 = vsel %vm303, %v295, %v300
    %v305 = vrsqrt.pop %v294
    %v306 = vmul.f32 %v305, %v294
    %v307 = vmul.f32 %v306, %v305
    %v308 = vmul.f32 0.5, %v307
    %v309 = vsub.f32 1.5, %v308
    %v310 = vmul.f32 %v305, %v309
    %vm311 = vweird.f32 %v294
    %vm312 = vweird.f32 %v305
    %vm313 = vmor %vm311, %vm312
    %v314 = vsel %vm313, %v305, %v310
    %v315 = vmul.f32 %v241, %v304
    %v316 = vmul.f32 %v242, %v314
    %319 = vrot.lane.b32.xlu0 %v304, 1
    %v320 = vpop.permute.xlu0 %319
    %321 = vrot.lane.b32.xlu0 %v314, 1
    %v322 = vpop.permute.xlu0 %321
    %v325 = vmul.f32 %v261, %v320
    %v326 = vmul.f32 %v262, %v322
    %v327 = vmul.f32 %v273, %v304
    %v328 = vmul.f32 %v274, %v314
    %v329 = vmul.f32 %v213, %v327
    %v330 = vmul.f32 %v214, %v328
    %v331 = vmul.f32 %v221, %v325
    %v332 = vmul.f32 %v222, %v326
    %335 = vrot.lane.b32.xlu0 %v331, 127
    %v336 = vpop.permute.xlu0 %335
    %337 = vrot.lane.b32.xlu0 %v332, 127
    %v338 = vpop.permute.xlu0 %337
    %v341 = vsub.f32 %v329, %v336
    %v342 = vsub.f32 %v330, %v338
    %345 = vrot.lane.b32.xlu0 %v315, 1
    %v346 = vpop.permute.xlu0 %345
    %347 = vrot.lane.b32.xlu0 %v316, 1
    %v348 = vpop.permute.xlu0 %347
    %v351 = vmul.f32 %v221, %v346
    %v352 = vmul.f32 %v222, %v348
    %355 = vrot.lane.b32.xlu0 %v327, 127
    %v356 = vpop.permute.xlu0 %355
    %357 = vrot.lane.b32.xlu0 %v328, 127
    %v358 = vpop.permute.xlu0 %357
    %v361 = vmul.f32 %v203, %v356
    %v362 = vmul.f32 %v204, %v358
    %365 = vrot.lane.b32.xlu0 %v361, 2
    %v366 = vpop.permute.xlu0 %365
    %367 = vrot.lane.b32.xlu0 %v362, 2
    %v368 = vpop.permute.xlu0 %367
    %v371 = vsub.f32 %v351, %v366
    %v372 = vsub.f32 %v352, %v368
    %375 = vrot.lane.b32.xlu0 %v325, 126
    %v376 = vpop.permute.xlu0 %375
    %377 = vrot.lane.b32.xlu0 %v326, 126
    %v378 = vpop.permute.xlu0 %377
    %v381 = vmul.f32 %v203, %v376
    %v382 = vmul.f32 %v204, %v378
    %v383 = vmul.f32 %v213, %v315
    %v384 = vmul.f32 %v214, %v316
    %387 = vrot.lane.b32.xlu0 %v383, 127
    %v388 = vpop.permute.xlu0 %387
    %389 = vrot.lane.b32.xlu0 %v384, 127
    %v390 = vpop.permute.xlu0 %389
    %v393 = vsub.f32 %v381, %v388
    %v394 = vsub.f32 %v382, %v390
    %395 = vset.pattern.permute.xlu0 17
    %396 = vperm.xlu0 %395, %v315
    %v397 = vpop.permute.xlu0 %396
    %399 = vset.pattern.permute.xlu0 17
    %400 = vperm.xlu0 %399, %v316
    %v401 = vpop.permute.xlu0 %400
    %403 = vset.pattern.permute.xlu0 18
    %404 = vperm.xlu0 %403, %v325
    %v405 = vpop.permute.xlu0 %404
    %407 = vset.pattern.permute.xlu0 18
    %408 = vperm.xlu0 %407, %v326
    %v409 = vpop.permute.xlu0 %408
    %411 = vset.pattern.permute.xlu0 17
    %412 = vperm.xlu0 %411, %v327
    %v413 = vpop.permute.xlu0 %412
    %415 = vset.pattern.permute.xlu0 17
    %416 = vperm.xlu0 %415, %v328
    %v417 = vpop.permute.xlu0 %416
    %420 = vset.pattern.permute.xlu0 17
    %421 = vperm.xlu0 %420, %v341
    %v422 = vpop.permute.xlu0 %421
    %425 = vset.pattern.permute.xlu0 17
    %426 = vperm.xlu0 %425, %v342
    %v427 = vpop.permute.xlu0 %426
    %430 = vset.pattern.permute.xlu0 18
    %431 = vperm.xlu0 %430, %v371
    %v432 = vpop.permute.xlu0 %431
    %435 = vset.pattern.permute.xlu0 18
    %436 = vperm.xlu0 %435, %v372
    %v437 = vpop.permute.xlu0 %436
    %440 = vset.pattern.permute.xlu0 16
    %441 = vperm.xlu0 %440, %v393
    %v442 = vpop.permute.xlu0 %441
    %445 = vset.pattern.permute.xlu0 16
    %446 = vperm.xlu0 %445, %v394
    %v447 = vpop.permute.xlu0 %446
    %450 = vset.pattern.permute.xlu0 16
    %451 = vperm.xlu0 %450, %v203
    %v452 = vpop.permute.xlu0 %451
    %455 = vset.pattern.permute.xlu0 16
    %456 = vperm.xlu0 %455, %v204
    %v457 = vpop.permute.xlu0 %456
    %460 = vset.pattern.permute.xlu0 17
    %461 = vperm.xlu0 %460, %v213
    %v462 = vpop.permute.xlu0 %461
    %465 = vset.pattern.permute.xlu0 17
    %466 = vperm.xlu0 %465, %v214
    %v467 = vpop.permute.xlu0 %466
    %470 = vset.pattern.permute.xlu0 18
    %471 = vperm.xlu0 %470, %v221
    %v472 = vpop.permute.xlu0 %471
    %475 = vset.pattern.permute.xlu0 18
    %476 = vperm.xlu0 %475, %v222
    %v477 = vpop.permute.xlu0 %476
    %v479 = vld [vmem:[%s1] sm:$0xff]
    %v480 = vld [vmem:[%s1 + $0x8] sm:$0xff]
    %481 = vst.msk [vmem:[#allocation2] sm:$0xff] %vm43, %v154
    %482 = vst.msk [vmem:[#allocation2 + $0x8] sm:$0xff] %vm43, %v157
    %485 = vrot.lane.b32.xlu0 %v479, 8
    %v486 = vpop.permute.xlu0 %485
    %487 = vrot.lane.b32.xlu0 %v480, 8
    %v488 = vpop.permute.xlu0 %487
    %vm491 = vcmask 130112
    %492 = vst.msk [vmem:[#allocation2] sm:$0xff] %vm491, %v486
    %493 = vst.msk [vmem:[#allocation2 + $0x8] sm:$0xff] %vm491, %v488
    %v494 = vmul.f32 %v452, %v154
    %v495 = vmul.f32 %v457, %v157
    %v496 = vmul.f32 %v462, %v154
    %v497 = vmul.f32 %v467, %v157
    %500 = vrot.lane.b32.xlu0 %v496, 120
    %v501 = vpop.permute.xlu0 %500
    %502 = vrot.lane.b32.xlu0 %v497, 120
    %v503 = vpop.permute.xlu0 %502
    %v506 = vadd.f32 %v494, %v501
    %v507 = vadd.f32 %v495, %v503
    %v508 = vmul.f32 %v472, %v154
    %v509 = vmul.f32 %v477, %v157
    %512 = vrot.lane.b32.xlu0 %v508, 112
    %v513 = vpop.permute.xlu0 %512
    %514 = vrot.lane.b32.xlu0 %v509, 112
    %v515 = vpop.permute.xlu0 %514
    %v518 = vadd.f32 %v506, %v513
    %v519 = vadd.f32 %v507, %v515
    %522 = vrot.lane.b32.xlu0 %v518, 8
    %v523 = vpop.permute.xlu0 %522
    %524 = vrot.lane.b32.xlu0 %v519, 8
    %v525 = vpop.permute.xlu0 %524
    %vm528 = vcmask 195712
    %529 = vst.msk [vmem:[#allocation2] sm:$0xff] %vm528, %v523
    %530 = vst.msk [vmem:[#allocation2 + $0x8] sm:$0xff] %vm528, %v525
    %v531 = vmul.f32 %v452, %v479
    %v532 = vmul.f32 %v457, %v480
    %v533 = vmul.f32 %v462, %v479
    %v534 = vmul.f32 %v467, %v480
    %537 = vrot.lane.b32.xlu0 %v533, 120
    %v538 = vpop.permute.xlu0 %537
    %539 = vrot.lane.b32.xlu0 %v534, 120
    %v540 = vpop.permute.xlu0 %539
    %v543 = vadd.f32 %v531, %v538
    %v544 = vadd.f32 %v532, %v540
    %v545 = vmul.f32 %v472, %v479
    %v546 = vmul.f32 %v477, %v480
    %549 = vrot.lane.b32.xlu0 %v545, 112
    %v550 = vpop.permute.xlu0 %549
    %551 = vrot.lane.b32.xlu0 %v546, 112
    %v552 = vpop.permute.xlu0 %551
    %v555 = vadd.f32 %v543, %v550
    %v556 = vadd.f32 %v544, %v552
    %559 = vrot.lane.b32.xlu0 %v555, 16
    %v560 = vpop.permute.xlu0 %559
    %561 = vrot.lane.b32.xlu0 %v556, 16
    %v562 = vpop.permute.xlu0 %561
    %vm565 = vcmask 261312
    %566 = vst.msk [vmem:[#allocation2] sm:$0xff] %vm565, %v560
    %567 = vst.msk [vmem:[#allocation2 + $0x8] sm:$0xff] %vm565, %v562
    %v568 = vmul.f32 %v397, %v154
    %v569 = vmul.f32 %v401, %v157
    %v570 = vmul.f32 %v405, %v154
    %v571 = vmul.f32 %v409, %v157
    %574 = vrot.lane.b32.xlu0 %v570, 120
    %v575 = vpop.permute.xlu0 %574
    %576 = vrot.lane.b32.xlu0 %v571, 120
    %v577 = vpop.permute.xlu0 %576
    %v580 = vadd.f32 %v568, %v575
    %v581 = vadd.f32 %v569, %v577
    %v582 = vmul.f32 %v413, %v154
    %v583 = vmul.f32 %v417, %v157
    %586 = vrot.lane.b32.xlu0 %v582, 112
    %v587 = vpop.permute.xlu0 %586
    %588 = vrot.lane.b32.xlu0 %v583, 112
    %v589 = vpop.permute.xlu0 %588
    %v592 = vadd.f32 %v580, %v587
    %v593 = vadd.f32 %v581, %v589
    %596 = vrot.lane.b32.xlu0 %v592, 24
    %v597 = vpop.permute.xlu0 %596
    %598 = vrot.lane.b32.xlu0 %v593, 24
    %v599 = vpop.permute.xlu0 %598
    %vm602 = vcmask 326912
    %603 = vst.msk [vmem:[#allocation2] sm:$0xff] %vm602, %v597
    %604 = vst.msk [vmem:[#allocation2 + $0x8] sm:$0xff] %vm602, %v599
    %v605 = vmul.f32 %v397, %v479
    %v606 = vmul.f32 %v401, %v480
    %v607 = vmul.f32 %v405, %v479
    %v608 = vmul.f32 %v409, %v480
    %611 = vrot.lane.b32.xlu0 %v607, 120
    %v612 = vpop.permute.xlu0 %611
    %613 = vrot.lane.b32.xlu0 %v608, 120
    %v614 = vpop.permute.xlu0 %613
    %v617 = vadd.f32 %v605, %v612
    %v618 = vadd.f32 %v606, %v614
    %v619 = vmul.f32 %v413, %v479
    %v620 = vmul.f32 %v417, %v480
    %623 = vrot.lane.b32.xlu0 %v619, 112
    %v624 = vpop.permute.xlu0 %623
    %625 = vrot.lane.b32.xlu0 %v620, 112
    %v626 = vpop.permute.xlu0 %625
    %v629 = vadd.f32 %v617, %v624
    %v630 = vadd.f32 %v618, %v626
    %633 = vrot.lane.b32.xlu0 %v629, 32
    %v634 = vpop.permute.xlu0 %633
    %635 = vrot.lane.b32.xlu0 %v630, 32
    %v636 = vpop.permute.xlu0 %635
    %vm639 = vcmask 392512
    %640 = vst.msk [vmem:[#allocation2] sm:$0xff] %vm639, %v634
    %641 = vst.msk [vmem:[#allocation2 + $0x8] sm:$0xff] %vm639, %v636
    %v642 = vmul.f32 %v422, %v154
    %v643 = vmul.f32 %v427, %v157
    %v644 = vmul.f32 %v432, %v154
    %v645 = vmul.f32 %v437, %v157
    %648 = vrot.lane.b32.xlu0 %v644, 120
    %v649 = vpop.permute.xlu0 %648
    %650 = vrot.lane.b32.xlu0 %v645, 120
    %v651 = vpop.permute.xlu0 %650
    %v654 = vadd.f32 %v642, %v649
    %v655 = vadd.f32 %v643, %v651
    %v656 = vmul.f32 %v442, %v154
    %v657 = vmul.f32 %v447, %v157
    %660 = vrot.lane.b32.xlu0 %v656, 112
    %v661 = vpop.permute.xlu0 %660
    %662 = vrot.lane.b32.xlu0 %v657, 112
    %v663 = vpop.permute.xlu0 %662
    %v666 = vadd.f32 %v654, %v661
    %v667 = vadd.f32 %v655, %v663
    %670 = vrot.lane.b32.xlu0 %v666, 40
    %v671 = vpop.permute.xlu0 %670
    %672 = vrot.lane.b32.xlu0 %v667, 40
    %v673 = vpop.permute.xlu0 %672
    %vm676 = vcmask 458112
    %677 = vst.msk [vmem:[#allocation2] sm:$0xff] %vm676, %v671
    %678 = vst.msk [vmem:[#allocation2 + $0x8] sm:$0xff] %vm676, %v673
    %v679 = vmul.f32 %v422, %v479
    %v680 = vmul.f32 %v427, %v480
    %v681 = vmul.f32 %v432, %v479
    %v682 = vmul.f32 %v437, %v480
    %685 = vrot.lane.b32.xlu0 %v681, 120
    %v686 = vpop.permute.xlu0 %685
    %687 = vrot.lane.b32.xlu0 %v682, 120
    %v688 = vpop.permute.xlu0 %687
    %v691 = vadd.f32 %v679, %v686
    %v692 = vadd.f32 %v680, %v688
    %v693 = vmul.f32 %v442, %v479
    %v694 = vmul.f32 %v447, %v480
    %697 = vrot.lane.b32.xlu0 %v693, 112
    %v698 = vpop.permute.xlu0 %697
    %699 = vrot.lane.b32.xlu0 %v694, 112
    %v700 = vpop.permute.xlu0 %699
    %v703 = vadd.f32 %v691, %v698
    %v704 = vadd.f32 %v692, %v700
    %707 = vrot.lane.b32.xlu0 %v703, 48
    %v708 = vpop.permute.xlu0 %707
    %709 = vrot.lane.b32.xlu0 %v704, 48
    %v710 = vpop.permute.xlu0 %709
    %vm713 = vcmask 523712
    %714 = vst.msk [vmem:[#allocation2] sm:$0xff] %vm713, %v708
    %715 = vst.msk [vmem:[#allocation2 + $0x8] sm:$0xff] %vm713, %v710
    %718 = vrot.lane.b32.xlu0 %v159, 64
    %v719 = vpop.permute.xlu0 %718
    %720 = vrot.lane.b32.xlu0 %v160, 64
    %v721 = vpop.permute.xlu0 %720
    %vm724 = vcmask 654848
    %725 = vst.msk [vmem:[#allocation2] sm:$0xff] %vm724, %v719
    %726 = vst.msk [vmem:[#allocation2 + $0x8] sm:$0xff] %vm724, %v721
    %v727 = vld [vmem:[#allocation2] sm:$0xff]
    %v728 = vld [vmem:[#allocation2 + $0x8] sm:$0xff]
    %vm729 = vcmask 654336
    %v731 = vsel %vm729, %v727, 0
    %v734 = vsel %vm729, %v728, 0
    %736 = vmatpush.msra.mxu0 0.0
    %737 = vmatpush.msra.mxu0 0.0
    %738 = vmatpush.msra.mxu0 0.0
    %739 = vmatpush.msra.mxu0 0.0
    %740 = vmatpush.msra.mxu0 0.0
    %741 = vmatpush.msra.mxu0 0.0
    %742 = vmatpush.msra.mxu0 %v31
    %743 = vmatpush.msra.mxu0 %v30
    %744 = vmatpush.msra.mxu0 %v29
    %745 = vmatpush.msra.mxu0 %v28
    %746 = vmatpush.msra.mxu0 %v27
    %747 = vmatpush.msra.mxu0 %v26
    %748 = vmatpush.msra.mxu0 %v25
    %749 = vmatpush.msra.mxu0 %v24
    %750 = vmatpush.msra.mxu0 %v23
    %751 = vmatpush.msra.mxu0 %v22
    %752 = vmatmul.f32.gmra.mxu0 %v731
    %v753 = vpop.f32.mrf.mxu0
    %v754 = vadd.f32 0.0, %v753
    %755 = vmatmul.f32.gmra.mxu0 %v734
    %v756 = vpop.f32.mrf.mxu0
    %v757 = vadd.f32 0.0, %v756
    %758 = vdwg.mxu0
    %v759 = vxor.u32 %v754, 2147483648
    %v760 = vxor.u32 %v757, 2147483648
    %v761 = vmul.f32 %v759, 1.442695
    %v762 = vpow.pop %v761
    %v763 = vmul.f32 %v760, 1.442695
    %v764 = vpow.pop %v763
    %v765 = vadd.f32 %v762, 1.0
    %v766 = vadd.f32 %v764, 1.0
    %v767 = vrcp.pop %v765
    %v768 = vmul.f32 %v765, %v767
    %v769 = vsub.f32 1.0, %v768
    %v770 = vmul.f32 %v767, %v769
    %v771 = vadd.f32 %v767, %v770
    %vm772 = vweird.f32 %v765
    %vm773 = vweird.f32 %v767
    %vm774 = vmor %vm772, %vm773
    %v775 = vsel %vm774, %v767, %v771
    %v776 = vand.u32 2147483647, %v765
    %vm777 = vcmp.eq.f32.partialorder %v776, 8.507059e+37
    %v778 = vand.u32 %v765, 2147483648
    %v779 = vor.u32 1.1754944e-38, %v778
    %v780 = vsel %vm777, %v779, %v775
    %v781 = vmul.f32 1.0, %v780
    %v782 = vrcp.pop %v766
    %v783 = vmul.f32 %v766, %v782
    %v784 = vsub.f32 1.0, %v783
    %v785 = vmul.f32 %v782, %v784
    %v786 = vadd.f32 %v782, %v785
    %vm787 = vweird.f32 %v766
    %vm788 = vweird.f32 %v782
    %vm789 = vmor %vm787, %vm788
    %v790 = vsel %vm789, %v782, %v786
    %v791 = vand.u32 2147483647, %v766
    %vm792 = vcmp.eq.f32.partialorder %v791, 8.507059e+37
    %v793 = vand.u32 %v766, 2147483648
    %v794 = vor.u32 1.1754944e-38, %v793
    %v795 = vsel %vm792, %v794, %v790
    %v796 = vmul.f32 1.0, %v795
    %v797 = vmul.f32 %v754, %v781
    %v798 = vmul.f32 %v757, %v796
    %799 = vst.msk [vmem:[#allocation2] sm:$0xff] %vm43, %v797
    %800 = vst.msk [vmem:[#allocation2 + $0x8] sm:$0xff] %vm43, %v798
    %803 = vrot.lane.b32.xlu0 %v781, 24
    %v804 = vpop.permute.xlu0 %803
    %805 = vrot.lane.b32.xlu0 %v796, 24
    %v806 = vpop.permute.xlu0 %805
    %v809 = vmul.f32 %v754, %v804
    %v810 = vmul.f32 %v757, %v806
    %813 = vrot.lane.b32.xlu0 %v809, 104
    %v814 = vpop.permute.xlu0 %813
    %815 = vrot.lane.b32.xlu0 %v810, 104
    %v816 = vpop.permute.xlu0 %815
    %819 = vst.msk [vmem:[#allocation2] sm:$0xff] %vm111, %v814
    %820 = vst.msk [vmem:[#allocation2 + $0x8] sm:$0xff] %vm111, %v816
    %821 = vrot.lane.b32.xlu0 %v159, 32
    %v822 = vpop.permute.xlu0 %821
    %823 = vrot.lane.b32.xlu0 %v160, 32
    %v824 = vpop.permute.xlu0 %823
    %vm827 = vcmask 392448
    %828 = vst.msk [vmem:[#allocation2] sm:$0xff] %vm827, %v822
    %829 = vst.msk [vmem:[#allocation2 + $0x8] sm:$0xff] %vm827, %v824
    %v830 = vld [vmem:[#allocation2] sm:$0xff]
    %v831 = vld [vmem:[#allocation2 + $0x8] sm:$0xff]
    %vm832 = vcmask 392192
    %v834 = vsel %vm832, %v830, 0
    %v837 = vsel %vm832, %v831, 0
    %839 = vmatpush.msra.mxu0 0.0
    %840 = vmatpush.msra.mxu0 0.0
    %841 = vmatpush.msra.mxu0 0.0
    %842 = vmatpush.msra.mxu0 0.0
    %843 = vmatpush.msra.mxu0 0.0
    %844 = vmatpush.msra.mxu0 0.0
    %845 = vmatpush.msra.mxu0 0.0
    %846 = vmatpush.msra.mxu0 0.0
    %847 = vmatpush.msra.mxu0 0.0
    %848 = vmatpush.msra.mxu0 0.0
    %849 = vmatpush.msra.mxu0 %v37
    %850 = vmatpush.msra.mxu0 %v36
    %851 = vmatpush.msra.mxu0 %v35
    %852 = vmatpush.msra.mxu0 %v34
    %853 = vmatpush.msra.mxu0 %v33
    %854 = vmatpush.msra.mxu0 %v32
    %855 = vmatmul.f32.gmra.mxu0 %v834
    %v856 = vpop.f32.mrf.mxu0
    %v857 = vadd.f32 0.0, %v856
    %858 = vmatmul.f32.gmra.mxu0 %v837
    %v859 = vpop.f32.mrf.mxu0
    %v860 = vadd.f32 0.0, %v859
    %861 = vdwg.mxu0
    %862 = vrot.lane.b32.xlu0 %v90, 88
    %v863 = vpop.permute.xlu0 %862
    %v865 = vadd.f32 %v857, %v863
    %v866 = vadd.f32 %v860, %v863
    %869 = vrot.lane.b32.xlu0 %v857, 96
    %v870 = vpop.permute.xlu0 %869
    %871 = vrot.lane.b32.xlu0 %v860, 96
    %v872 = vpop.permute.xlu0 %871
    %v875 = vmul.f32 %v865, %v870
    %v876 = vmul.f32 %v866, %v872
    %v877 = vmul.f32 %v857, %v870
    %v878 = vmul.f32 %v860, %v872
    %879 = vst.msk [vmem:[#allocation2] sm:$0xff] %vm43, %v875
    %880 = vst.msk [vmem:[#allocation2 + $0x8] sm:$0xff] %vm43, %v876
    %v881 = vmul.f32 %v397, %v877
    %v882 = vmul.f32 %v401, %v878
    %v883 = vmul.f32 %v422, %v877
    %v884 = vmul.f32 %v427, %v878
    %887 = vrot.lane.b32.xlu0 %v883, 120
    %v888 = vpop.permute.xlu0 %887
    %889 = vrot.lane.b32.xlu0 %v884, 120
    %v890 = vpop.permute.xlu0 %889
    %v893 = vadd.f32 %v881, %v888
    %v894 = vadd.f32 %v882, %v890
    %v895 = vmul.f32 %v452, %v877
    %v896 = vmul.f32 %v457, %v878
    %899 = vrot.lane.b32.xlu0 %v895, 8
    %v900 = vpop.permute.xlu0 %899
    %901 = vrot.lane.b32.xlu0 %v896, 8
    %v902 = vpop.permute.xlu0 %901
    %v905 = vadd.f32 %v893, %v900
    %v906 = vadd.f32 %v894, %v902
    %909 = vrot.lane.b32.xlu0 %v905, 120
    %v910 = vpop.permute.xlu0 %909
    %911 = vrot.lane.b32.xlu0 %v906, 120
    %v912 = vpop.permute.xlu0 %911
    %915 = vst.msk [vmem:[#allocation2] sm:$0xff] %vm491, %v910
    %916 = vst.msk [vmem:[#allocation2 + $0x8] sm:$0xff] %vm491, %v912
    %v917 = vmul.f32 %v405, %v877
    %v918 = vmul.f32 %v409, %v878
    %v919 = vmul.f32 %v432, %v877
    %v920 = vmul.f32 %v437, %v878
    %923 = vrot.lane.b32.xlu0 %v919, 120
    %v924 = vpop.permute.xlu0 %923
    %925 = vrot.lane.b32.xlu0 %v920, 120
    %v926 = vpop.permute.xlu0 %925
    %v929 = vadd.f32 %v917, %v924
    %v930 = vadd.f32 %v918, %v926
    %v931 = vmul.f32 %v462, %v877
    %v932 = vmul.f32 %v467, %v878
    %935 = vrot.lane.b32.xlu0 %v931, 8
    %v936 = vpop.permute.xlu0 %935
    %937 = vrot.lane.b32.xlu0 %v932, 8
    %v938 = vpop.permute.xlu0 %937
    %v941 = vadd.f32 %v929, %v936
    %v942 = vadd.f32 %v930, %v938
    %943 = vst.msk [vmem:[#allocation2] sm:$0xff] %vm528, %v941
    %944 = vst.msk [vmem:[#allocation2 + $0x8] sm:$0xff] %vm528, %v942
    %v945 = vmul.f32 %v413, %v877
    %v946 = vmul.f32 %v417, %v878
    %v947 = vmul.f32 %v442, %v877
    %v948 = vmul.f32 %v447, %v878
    %951 = vrot.lane.b32.xlu0 %v947, 120
    %v952 = vpop.permute.xlu0 %951
    %953 = vrot.lane.b32.xlu0 %v948, 120
    %v954 = vpop.permute.xlu0 %953
    %v957 = vadd.f32 %v945, %v952
    %v958 = vadd.f32 %v946, %v954
    %v959 = vmul.f32 %v472, %v877
    %v960 = vmul.f32 %v477, %v878
    %963 = vrot.lane.b32.xlu0 %v959, 8
    %v964 = vpop.permute.xlu0 %963
    %965 = vrot.lane.b32.xlu0 %v960, 8
    %v966 = vpop.permute.xlu0 %965
    %v969 = vadd.f32 %v957, %v964
    %v970 = vadd.f32 %v958, %v966
    %973 = vrot.lane.b32.xlu0 %v969, 8
    %v974 = vpop.permute.xlu0 %973
    %975 = vrot.lane.b32.xlu0 %v970, 8
    %v976 = vpop.permute.xlu0 %975
    %979 = vst.msk [vmem:[#allocation2] sm:$0xff] %vm565, %v974
    %980 = vst.msk [vmem:[#allocation2 + $0x8] sm:$0xff] %vm565, %v976
    %v981 = vld [vmem:[#allocation2] sm:$0xff]
    %v982 = vld [vmem:[#allocation2 + $0x8] sm:$0xff]
    %983 = vrot.lane.b32.xlu0 %v90, 80
    %v984 = vpop.permute.xlu0 %983
    %vm986 = vcmask 261120
    %v988 = vsel %vm986, %v42, 0
    %990 = vmatpush.msra.mxu0 0.0
    %991 = vmatpush.msra.mxu0 0.0
    %992 = vmatpush.msra.mxu0 0.0
    %993 = vmatpush.msra.mxu0 0.0
    %994 = vmatpush.msra.mxu0 0.0
    %995 = vmatpush.msra.mxu0 0.0
    %996 = vmatpush.msra.mxu0 0.0
    %997 = vmatpush.msra.mxu0 0.0
    %998 = vmatpush.msra.mxu0 0.0
    %999 = vmatpush.msra.mxu0 0.0
    %1000 = vmatpush.msra.mxu0 0.0
    %1001 = vmatpush.msra.mxu0 0.0
    %1002 = vmatpush.msra.mxu0 %v41
    %1003 = vmatpush.msra.mxu0 %v40
    %1004 = vmatpush.msra.mxu0 %v39
    %1005 = vmatpush.msra.mxu0 %v38
    %1006 = vmatmul.f32.gmra.mxu0 %v988
    %v1007 = vpop.f32.mrf.mxu0
    %v1008 = vadd.f32 %v984, %v1007
    %1009 = vdwg.mxu0
    %1010 = vxpose.xlu0.b32.start [1/16] %v127, 128
    %1011 = vxpose.xlu0.b32.cont [2/16] %v128, 128
    %1012 = vxpose.xlu0.b32.cont [3/16] 0.0, 128
    %1013 = vxpose.xlu0.b32.cont [4/16] 0.0, 128
    %1014 = vxpose.xlu0.b32.cont [5/16] 0.0, 128
    %1015 = vxpose.xlu0.b32.cont [6/16] 0.0, 128
    %1016 = vxpose.xlu0.b32.cont [7/16] 0.0, 128
    %1017 = vxpose.xlu0.b32.cont [8/16] 0.0, 128
    %1018 = vxpose.xlu0.b32.cont [9/16] 0.0, 128
    %1019 = vxpose.xlu0.b32.cont [10/16] 0.0, 128
    %1020 = vxpose.xlu0.b32.cont [11/16] 0.0, 128
    %1021 = vxpose.xlu0.b32.cont [12/16] 0.0, 128
    %1022 = vxpose.xlu0.b32.cont [13/16] 0.0, 128
    %1023 = vxpose.xlu0.b32.cont [14/16] 0.0, 128
    %1024 = vxpose.xlu0.b32.cont [15/16] 0.0, 128
    %1025 = vxpose.xlu0.b32.end [16/16] 0.0, 128
    %v1026 = vpop.trf.xlu0
    %v1027 = vpop.trf.xlu0
    %v1028 = vpop.trf.xlu0
    %v1029 = vpop.trf.xlu0
    %v1030 = vpop.trf.xlu0
    %v1031 = vpop.trf.xlu0
    %v1032 = vpop.trf.xlu0
    %v1033 = vpop.trf.xlu0
    %v1034 = vpop.trf.xlu0
    %v1035 = vpop.trf.xlu0
    %v1036 = vpop.trf.xlu0
    %v1037 = vpop.trf.xlu0
    %v1038 = vpop.trf.xlu0
    %v1039 = vpop.trf.xlu0
    %v1040 = vpop.trf.xlu0
    %v1041 = vpop.trf.xlu0
    %vm1042 = vcmask 130048
    %v1044 = vsel %vm1042, %v1026, 0
    %1046 = vmatpush.msra.mxu0 0.0
    %1047 = vmatpush.msra.mxu0 0.0
    %1048 = vmatpush.msra.mxu0 0.0
    %1049 = vmatpush.msra.mxu0 0.0
    %1050 = vmatpush.msra.mxu0 0.0
    %1051 = vmatpush.msra.mxu0 0.0
    %1052 = vmatpush.msra.mxu0 0.0
    %1053 = vmatpush.msra.mxu0 0.0
    %1054 = vmatpush.msra.mxu0 0.0
    %1055 = vmatpush.msra.mxu0 0.0
    %1056 = vmatpush.msra.mxu0 0.0
    %1057 = vmatpush.msra.mxu0 0.0
    %1058 = vmatpush.msra.mxu0 0.0
    %1059 = vmatpush.msra.mxu0 0.0
    %1060 = vmatpush.msra.mxu0 %v982
    %1061 = vmatpush.msra.mxu0 %v981
    %1062 = vmatmul.f32.gmra.mxu0 %v1044
    %v1063 = vpop.f32.mrf.mxu0
    %v1064 = vadd.f32 %v1008, %v1063
    %1065 = vdwg.mxu0
    %1066 = vst.msk [vmem:[#allocation3] sm:$0xff] %vm986, %v1064
    // Predicated region
    $region22: #{update_node_forward.1} parent=1 // pred_check
      _
    $region23: #{update_node_forward.1} parent=1 // pred_check_branch
      %1068 = sbr.rel (0) target = $region25
    $region24: #{update_node_forward.1} parent=1 // pred_region
      %1070 = vsyncadd [#allocation4], 0
      %s1072 = sshll.u32 [#allocation3], 4
      %s1073 = int_to_ptr.vmem [resolvable:$true] %s1072
      %s1074 = sshll.u32 %s5, 4
      %s1075 = int_to_ptr.hbm [resolvable:$true] %s1074
      %1077 = dma.vmem_to_hbm [thread:$0]  %s1073, 128, %s1075, [#allocation4]
    $region25: #{update_node_forward.1} parent=1 // pred_fallthru
      _
    // Predicated region
    $region26: #{update_node_forward.1} parent=1 // pred_check
      _
    $region27: #{update_node_forward.1} parent=1 // pred_check_branch
      %1079 = sbr.rel (0) target = $region29
    $region28: #{update_node_forward.1} parent=1 // pred_region
      %1081 = dma.done [#allocation4], 128
    $region29: #{update_node_forward.1} parent=1 // pred_fallthru
      _
    %1082 = vsyncpa [#allocation4], 1

</llo_original>
